<compile_context>
chip_gen: v7x
topology: tpu7x:2x2x1
jax: 0.10.0
libtpu: 0.0.40
codegen_flags: <defaults>
</compile_context>

<pallas_src>
import functools

import jax
import jax.numpy as jnp
from jax.experimental import pallas as pl
from jax.experimental.pallas import tpu as pltpu


# --------------------------------------------------------------------------- #
# Kernel: only the O(N^2) per-edge work lives here.
# --------------------------------------------------------------------------- #
def gat_input_kernel(s_dst_ref,   # (TM, 1)    score dtype  a_dst . z[i]      (dst tile)
                     s_src_ref,   # (1, N)     score dtype  a_src . z[j]      (all sources)
                     z_i_ref,     # (TM, Fout) f32          fc2(attr)         (dst tile)
                     z_all_ref,   # (N, Fout)  bf16         fc1(attr)         (all sources)
                     d_ref,       # (TM, N)    bf16         coef * d[i, j]    (pre-scaled)
                     adj_ref,     # (TM, N)    int8         adjacency [dst tile, src]
                     h_ref,       # (TM, Fout) f32          output tile
                     *, slope):
    # e[i, j] = leaky_relu(a_src.z[j] + a_dst.z[i] + coef * d[i, j])
    e = (s_dst_ref[...] + s_src_ref[...]) + d_ref[...]
    e = jnp.where(e > 0, e, slope * e)                               # F.leaky_relu(0.01)
    e = jnp.where(adj_ref[...] != 0, e, jnp.asarray(-1e30, e.dtype))  # mask non-edges

    # Masked softmax over incoming edges (src axis = lanes).  Precondition: every
    # dst row has >= 1 unmasked edge (self-loop), so masked entries underflow to
    # exactly 0 after exp and no second mask/select is needed.
    m = jnp.max(e, axis=-1, keepdims=True)
    p = jnp.exp(e.astype(jnp.float32) - m.astype(jnp.float32))        # f32 exp margin
    denom = jnp.sum(p, axis=-1, keepdims=True)                         # f32 row sum

    # Neighbor aggregation on the MXU (bf16 x bf16 -> f32 acc); normalize AFTER
    # the matmul with an EUP reciprocal (no O(N^2) divide).
    agg = jnp.dot(p.astype(jnp.bfloat16), z_all_ref[...],
                  preferred_element_type=jnp.float32)                  # (TM, Fout)
    h = z_i_ref[...] + agg * pl.reciprocal(denom, approx=True)
    h_ref[...] = jnp.maximum(h, 0.0).astype(h_ref.dtype)              # F.relu


# --------------------------------------------------------------------------- #
# Chip-aware helpers (robust fallbacks if the query fails).
# --------------------------------------------------------------------------- #
def _device_kind():
    try:
        return jax.devices()[0].device_kind.lower()
    except Exception:
        return ""


def _score_dtype(kind):
    # v6e / v7x VALUs have a bf16 datapath; v5e (and older) do not -> keep f32 there.
    return jnp.bfloat16 if ("v6" in kind or "v7" in kind) else jnp.float32


def _vmem_limit_bytes():
    try:
        cap = int(pltpu.get_tpu_info().vmem_capacity_bytes)
    except Exception:
        cap = 64 * 1024 * 1024
    # Leave headroom: half of physical VMEM, clipped to [32 MiB, 96 MiB].
    return max(32 * 1024 * 1024, min(cap // 2, 96 * 1024 * 1024))


def _default_tm(n, kind):
    if n <= 256:
        return n                      # single grid step for small graphs
    tm = 128 if "v7" in kind else 256  # v7x: 64 MiB VMEM -> smaller tiles
    while n % tm and tm > 32:
        tm //= 2
    return tm


# --------------------------------------------------------------------------- #
# One-time O(N^2) preparation (do this OUTSIDE the per-call hot path): fold the
# scalar fc0 ∘ attn_fc t-coefficient into d and narrow both edge tensors.
# --------------------------------------------------------------------------- #
def prepare_graph(d, adj, params):
    """d: (N, N, in_edim=1) [dst, src]; adj: (N, N) {0,1} [dst, src]."""
    out_ndim = params["w1"].shape[0]
    a = params["attn"][0].astype(jnp.float32)
    coef = params["w0"].astype(jnp.float32)[0, 0] * a[2 * out_ndim]
    d_bf16 = (coef * d[..., 0].astype(jnp.float32)).astype(jnp.bfloat16)  # (N, N)
    adj_i8 = (adj != 0).astype(jnp.int8)                                   # (N, N)
    return d_bf16, adj_i8


# --------------------------------------------------------------------------- #
# Forward wrapper: hoists all grid-invariant node-level matmuls, then launches
# the dst-row-tiled kernel.
# --------------------------------------------------------------------------- #
def gat_input_layer(attr, d_bf16, adj_i8, params, *, tm=None):
    """attr: (N, Fin) node features; d_bf16/adj_i8: output of prepare_graph."""
    N, Fin = attr.shape
    Fout = params["w1"].shape[0]
    kind = _device_kind()
    score_dtype = _score_dtype(kind)

    if tm is None:
        tm = _default_tm(N, kind)
    # int8 adjacency tile -> require tm % 32 == 0 (or a single full-extent tile).
    assert N % tm == 0 and (tm % 32 == 0 or tm == N), (N, tm)

    a = params["attn"][0].astype(jnp.float32)
    a_src, a_dst = a[:Fout], a[Fout:2 * Fout]
    w1 = params["w1"].astype(jnp.float32)
    w2 = params["w2"].astype(jnp.float32)
    attr_f = attr.astype(jnp.float32)

    # Grid-invariant node-level work (O(N*Fin*Fout), tiny) computed ONCE here:
    z_all = attr_f @ w1.T                                        # (N, Fout) f32
    z_i = attr_f @ w2.T                                          # (N, Fout) f32
    s_dst = (z_all @ a_dst).reshape(N, 1).astype(score_dtype)    # a_dst . z[i]
    s_src = (z_all @ a_src).reshape(1, N).astype(score_dtype)    # a_src . z[j]
    z_all_bf16 = z_all.astype(jnp.bfloat16)                      # MXU rhs, cast once

    vmem = pltpu.MemorySpace.VMEM
    kernel = functools.partial(gat_input_kernel, slope=0.01)

    fn = pl.pallas_call(
        kernel,
        out_shape=jax.ShapeDtypeStruct((N, Fout), jnp.float32),
        grid=(N // tm,),
        in_specs=[
            pl.BlockSpec((tm, 1), lambda i: (i, 0)),        # s_dst tile
            pl.BlockSpec(memory_space=vmem),                # s_src row (grid-invariant)
            pl.BlockSpec((tm, Fout), lambda i: (i, 0)),     # z_i tile
            pl.BlockSpec(memory_space=vmem),                # z_all bf16 (grid-invariant)
            pl.BlockSpec((tm, N), lambda i: (i, 0)),        # d tile   (bf16, coef folded)
            pl.BlockSpec((tm, N), lambda i: (i, 0)),        # adj tile (int8)
        ],
        out_specs=pl.BlockSpec((tm, Fout), lambda i: (i, 0)),
        compiler_params=pltpu.CompilerParams(
            dimension_semantics=("parallel",),               # dst tiles across TCs
            vmem_limit_bytes=_vmem_limit_bytes(),
        ),
    )
    return fn(s_dst, s_src, z_i, z_all_bf16, d_bf16, adj_i8)


# --------------------------------------------------------------------------- #
# Pure-JAX f32 reference with identical dense-graph semantics.
# --------------------------------------------------------------------------- #
def ref_forward(attr, d, adj, params):
    t = d @ params["w0"].T                                    # (N, N, out_edim)
    z = attr @ params["w1"].T                                 # (N, Fout)
    z_i = attr @ params["w2"].T
    N, Fout = z.shape
    z_src = jnp.broadcast_to(z[None, :, :], (N, N, Fout))     # index j (src)
    z_dst = jnp.broadcast_to(z[:, None, :], (N, N, Fout))     # index i (dst)
    cat = jnp.concatenate([z_src, z_dst, t], axis=-1)         # concat order: [src, dst, t]
    e = (cat @ params["attn"].T)[..., 0]
    e = jax.nn.leaky_relu(e, 0.01)
    e = jnp.where(adj > 0, e, -1e30)
    alpha = jax.nn.softmax(e, axis=-1)
    alpha = jnp.where(adj > 0, alpha, 0.0)
    z_neighbor = alpha @ z
    return jax.nn.relu(z_i + z_neighbor)


if __name__ == "__main__":
    key = jax.random.PRNGKey(0)
    N, in_ndim, out_ndim = 64, 8, 32
    in_edim = out_edim = 1
    tm = 32   # 2 dst-row tiles; the "parallel" grid axis maps to v7x's 2 TCs

    k = jax.random.split(key, 7)
    attr = jax.random.normal(k[0], (N, in_ndim), jnp.float32)
    d = jax.random.normal(k[1], (N, N, in_edim), jnp.float32)
    adj = (jax.random.uniform(k[2], (N, N)) < 0.3).astype(jnp.float32)
    adj = jnp.maximum(adj, jnp.eye(N, dtype=jnp.float32))     # self-loops (precondition)

    # Deterministic synthetic parameters (shapes from the module __init__).
    params = {
        "w0": jax.random.normal(k[3], (out_edim, in_edim), jnp.float32) * 0.5,
        "w1": jax.random.normal(k[4], (out_ndim, in_ndim), jnp.float32) / jnp.sqrt(in_ndim),
        "w2": jax.random.normal(k[5], (out_ndim, in_ndim), jnp.float32) / jnp.sqrt(in_ndim),
        "attn": jax.random.normal(k[6], (1, 2 * out_ndim + out_edim), jnp.float32) * 0.1,
        # self.weights (2, 1) exists in the module but is dead code in forward -> omitted.
    }

    # One-time O(N^2) narrowing (outside the per-call hot path).
    d_bf16, adj_i8 = prepare_graph(d, adj, params)

    h = jax.block_until_ready(gat_input_layer(attr, d_bf16, adj_i8, params, tm=tm))
    h_ref = ref_forward(attr, d, adj, params)
    assert h.shape == (N, out_ndim)
    # bf16 edge features / bf16 score math (v6e/v7x) / bf16 MXU aggregation / approx
    # EUP reciprocal -> relaxed tolerance (denominator + exp kept in f32).
    max_err = float(jnp.max(jnp.abs(h - h_ref)))
    assert jnp.allclose(h, h_ref, atol=5e-2, rtol=5e-2), max_err
    print("KERNEL_OK")
</pallas_src>

<mosaic_0001>
module attributes {stable_mosaic.version = 11 : i64} {
  func.func @gat_input_kernel(%arg0: i32, %arg1: memref<32x1xf32, #tpu.memory_space<vmem>>, %arg2: memref<1x64xf32, #tpu.memory_space<vmem>>, %arg3: memref<32x32xf32, #tpu.memory_space<vmem>>, %arg4: memref<64x32xbf16, #tpu.memory_space<vmem>>, %arg5: memref<32x64xbf16, #tpu.memory_space<vmem>>, %arg6: memref<32x64xi8, #tpu.memory_space<vmem>>, %arg7: memref<32x32xf32, #tpu.memory_space<vmem>>) attributes {dimension_semantics = [#tpu.dimension_semantics<parallel>], iteration_bounds = array<i64: 2>, scalar_prefetch = 0 : i64, scratch_operands = 0 : i64, tpu.core_type = #tpu.core_type<tc>, window_params = [{transform_indices = @transform_0, window_bounds = array<i64: 32, 1>}, {pipeline_mode = #tpu.pipeline_mode<synchronous>, transform_indices = @transform_1, window_bounds = array<i64: 1, 64>}, {transform_indices = @transform_2, window_bounds = array<i64: 32, 32>}, {pipeline_mode = #tpu.pipeline_mode<synchronous>, transform_indices = @transform_3, window_bounds = array<i64: 64, 32>}, {transform_indices = @transform_4, window_bounds = array<i64: 32, 64>}, {transform_indices = @transform_5, window_bounds = array<i64: 32, 64>}, {transform_indices = @transform_6, window_bounds = array<i64: 32, 32>}]} {
    %c0 = arith.constant 0 : index
    %c0_0 = arith.constant 0 : index
    %0 = vector.load %arg1[%c0, %c0_0] : memref<32x1xf32, #tpu.memory_space<vmem>>, vector<32x1xf32>
    %c0_1 = arith.constant 0 : index
    %c0_2 = arith.constant 0 : index
    %1 = vector.load %arg2[%c0_1, %c0_2] : memref<1x64xf32, #tpu.memory_space<vmem>>, vector<1x64xf32>
    %2 = vector.broadcast %0 : vector<32x1xf32> to vector<32x64xf32>
    %3 = vector.broadcast %1 : vector<1x64xf32> to vector<32x64xf32>
    %4 = arith.addf %2, %3 : vector<32x64xf32>
    %c0_3 = arith.constant 0 : index
    %c0_4 = arith.constant 0 : index
    %5 = vector.load %arg5[%c0_3, %c0_4] : memref<32x64xbf16, #tpu.memory_space<vmem>>, vector<32x64xbf16>
    %6 = arith.extf %5 : vector<32x64xbf16> to vector<32x64xf32>
    %7 = arith.addf %4, %6 : vector<32x64xf32>
    %cst = arith.constant 0.000000e+00 : f32
    %8 = vector.broadcast %cst : f32 to vector<32x64xf32>
    %9 = arith.cmpf ogt, %7, %8 : vector<32x64xf32>
    %cst_5 = arith.constant 0.00999999977 : f32
    %10 = vector.broadcast %cst_5 : f32 to vector<32x64xf32>
    %11 = arith.mulf %10, %7 : vector<32x64xf32>
    %12 = arith.select %9, %7, %11 : vector<32x64xi1>, vector<32x64xf32>
    %c0_6 = arith.constant 0 : index
    %c0_7 = arith.constant 0 : index
    %13 = vector.load %arg6[%c0_6, %c0_7] : memref<32x64xi8, #tpu.memory_space<vmem>>, vector<32x64xi8>
    %c0_i8 = arith.constant 0 : i8
    %14 = vector.broadcast %c0_i8 : i8 to vector<32x64xi8>
    %15 = arith.cmpi ne, %13, %14 : vector<32x64xi8>
    %cst_8 = arith.constant -1.000000e+30 : f32
    %16 = vector.broadcast %cst_8 : f32 to vector<32x64xf32>
    %17 = arith.select %15, %12, %16 : vector<32x64xi1>, vector<32x64xf32>
    %cst_9 = arith.constant dense<0xFF800000> : vector<32xf32>
    %18 = vector.multi_reduction <maximumf>, %17, %cst_9 [1] : vector<32x64xf32> to vector<32xf32>
    %19 = vector.shape_cast %18 : vector<32xf32> to vector<32x1xf32>
    %20 = vector.broadcast %19 : vector<32x1xf32> to vector<32x64xf32>
    %21 = arith.subf %17, %20 : vector<32x64xf32>
    %22 = math.exp %21 : vector<32x64xf32>
    %cst_10 = arith.constant dense<0.000000e+00> : vector<32xf32>
    %23 = vector.multi_reduction <add>, %22, %cst_10 [1] : vector<32x64xf32> to vector<32xf32>
    %24 = vector.shape_cast %23 : vector<32xf32> to vector<32x1xf32>
    %25 = arith.truncf %22 : vector<32x64xf32> to vector<32x64xbf16>
    %c0_11 = arith.constant 0 : index
    %c0_12 = arith.constant 0 : index
    %26 = vector.load %arg4[%c0_11, %c0_12] : memref<64x32xbf16, #tpu.memory_space<vmem>>, vector<64x32xbf16>
    %cst_13 = arith.constant dense<0.000000e+00> : vector<32x32xf32>
    %27 = tpu.matmul %25, %26, %cst_13 {dimension_numbers = #tpu.dot_dimension_numbers<[1], [0], [0], [1], [0, 0, 1, 1], [], []>} : vector<32x64xbf16>, vector<64x32xbf16>, vector<32x32xf32> -> vector<32x32xf32>
    %c0_14 = arith.constant 0 : index
    %c0_15 = arith.constant 0 : index
    %28 = vector.load %arg3[%c0_14, %c0_15] : memref<32x32xf32, #tpu.memory_space<vmem>>, vector<32x32xf32>
    %29 = tpu.reciprocal %24 {approx = true} : vector<32x1xf32> -> vector<32x1xf32>
    %30 = vector.broadcast %29 : vector<32x1xf32> to vector<32x32xf32>
    %31 = arith.mulf %27, %30 : vector<32x32xf32>
    %32 = arith.addf %28, %31 : vector<32x32xf32>
    %cst_16 = arith.constant 0.000000e+00 : f32
    %33 = vector.broadcast %cst_16 : f32 to vector<32x32xf32>
    %34 = arith.maximumf %32, %33 : vector<32x32xf32>
    %c0_17 = arith.constant 0 : index
    %c0_18 = arith.constant 0 : index
    %35 = vector.load %arg7[%c0_17, %c0_18] : memref<32x32xf32, #tpu.memory_space<vmem>>, vector<32x32xf32>
    tpu.vector_store %arg7[%c0_17, %c0_18], %34 {strides = array<i32>} : memref<32x32xf32, #tpu.memory_space<vmem>>, vector<32x32xf32>,
    return
  }
  func.func @transform_0(%arg0: i32) -> (i32, i32) {
    %c0_i32 = arith.constant 0 : i32
    %c0_i32_0 = arith.constant 0 : i32
    return %arg0, %c0_i32 : i32, i32
  }
  func.func @transform_1(%arg0: i32) -> (i32, i32) {
    %c0_i32 = arith.constant 0 : i32
    %c0_i32_0 = arith.constant 0 : i32
    %c0_i32_1 = arith.constant 0 : i32
    return %c0_i32, %c0_i32_0 : i32, i32
  }
  func.func @transform_2(%arg0: i32) -> (i32, i32) {
    %c0_i32 = arith.constant 0 : i32
    %c0_i32_0 = arith.constant 0 : i32
    return %arg0, %c0_i32 : i32, i32
  }
  func.func @transform_3(%arg0: i32) -> (i32, i32) {
    %c0_i32 = arith.constant 0 : i32
    %c0_i32_0 = arith.constant 0 : i32
    %c0_i32_1 = arith.constant 0 : i32
    return %c0_i32, %c0_i32_0 : i32, i32
  }
  func.func @transform_4(%arg0: i32) -> (i32, i32) {
    %c0_i32 = arith.constant 0 : i32
    %c0_i32_0 = arith.constant 0 : i32
    return %arg0, %c0_i32 : i32, i32
  }
  func.func @transform_5(%arg0: i32) -> (i32, i32) {
    %c0_i32 = arith.constant 0 : i32
    %c0_i32_0 = arith.constant 0 : i32
    return %arg0, %c0_i32 : i32, i32
  }
  func.func @transform_6(%arg0: i32) -> (i32, i32) {
    %c0_i32 = arith.constant 0 : i32
    %c0_i32_0 = arith.constant 0 : i32
    return %arg0, %c0_i32 : i32, i32
  }
}

</mosaic_0001>

<llo_original>
// kernel: tpu_custom_call.1
$region0: #{tpu_custom_call.1}
  #allocation0 [shape = 'u32[]', space=smem, size = 0x4, offset = 0x4, fixed_abs, tag = 'smem constant byte address 0x4 - core index']
  #allocation1 [shape = 'u32[144,128]{1,0:T(1,128)}', space=vmem, size = 0x12000, scoped, tag = 'internal scratch']
  %s0 = inlined_call_operand.vmem [shape: f32[64,1], index: 0, kind: input, shape index: {}]
  %s1 = inlined_call_operand.vmem [shape: f32[1,64], index: 1, kind: input, shape index: {}]
  %s2 = inlined_call_operand.vmem [shape: f32[64,32], index: 2, kind: input, shape index: {}]
  %s3 = inlined_call_operand.vmem [shape: bf16[64,32], index: 3, kind: input, shape index: {}]
  %s4 = inlined_call_operand.vmem [shape: bf16[64,64], index: 4, kind: input, shape index: {}]
  %s5 = inlined_call_operand.vmem [shape: s8[64,64], index: 5, kind: input, shape index: {}]
  %s6 = inlined_call_operand.vmem [shape: f32[64,32], index: 6, kind: output, shape index: {}]
  %s7 = sld [smem:[#allocation0]]
  $region57: #{tpu_custom_call.1} parent=0
    _
  %s9 = ssub.s32 1, %s7
  %s10 = scalar_select 0, %s9, %s7
  loop: start=0, step=1, limit=4
  $region2: #{tpu_custom_call.1} parent=0 // loop_pre_header
    _
  $region3: #{tpu_custom_call.1} parent=0 // loop_header
    %s12 = sphi 0, %s16
    %p13 = scmp.ge.s32.totalorder %s12, 4
    %s22 = sphi 0, %s24
    %s25 = sphi 0, %s22
    %s26 = sphi 0, %s25
    %s42 = sphi 0, %s26
    %s46 = sphi 0, %s46
    %s48 = sphi 0, %s46
    %s49 = sphi 0, %s48
    %s63 = sphi 0, %s49
    %s69 = sphi 0, %s71
    %s72 = sphi 0, %s69
    %s73 = sphi 0, %s72
    %s89 = sphi 0, %s73
    %s93 = sphi 0, %s93
    %s95 = sphi 0, %s93
    %s96 = sphi 0, %s95
    %s110 = sphi 0, %s96
    %s116 = sphi 0, %s118
    %s119 = sphi 0, %s116
    %s120 = sphi 0, %s119
    %s136 = sphi 0, %s120
    %s142 = sphi 0, %s144
    %s145 = sphi 0, %s142
    %s146 = sphi 0, %s145
    %s162 = sphi 0, %s146
    %s168 = sphi 0, %s170
    %s171 = sphi 0, %s168
    %s172 = sphi 0, %s171
    %s188 = sphi 0, %s172
  $region4: #{tpu_custom_call.1} parent=0 // loop_header_branch
    %15 = sbr.rel (%p13) target = $region8
  $region5: #{tpu_custom_call.1} parent=0 // loop_body
    %s17 = ssub.s32 %s12, 1
    %s18 = ssub.s32 %s12, 2
    %s19 = sadd.s32 %s12, 1
    %s20 = ssub.s32 %s12, %s19
    %p21 = scmp.eq.s32.totalorder %s20, 0
    %s23 = sadd.s32 %s22, 1
    %s24 = scalar_select %p21, %s22, %s23
    %p27 = pneg %p21
    %p28 = scmp.eq.s32.totalorder %s12, 1
    %p29 = por %p27, %p28
    %p30 = scmp.ne.s32.totalorder %s22, %s25
    %p31 = scmp.eq.s32.totalorder %s12, 0
    %p32 = por %p30, %p31
    %p33 = scmp.ne.s32.totalorder %s22, %s25
    %p34 = scmp.eq.s32.totalorder %s17, 1
    %p35 = por %p33, %p34
    %p36 = scmp.ne.s32.totalorder %s25, %s26
    %p37 = scmp.eq.s32.totalorder %s17, 0
    %p38 = por %p36, %p37
    %p39 = scmp.ne.s32.totalorder %s25, %s26
    %p40 = scmp.eq.s32.totalorder %s18, 1
    %p41 = por %p39, %p40
    %p43 = scmp.ne.s32.totalorder %s26, %s42
    %p44 = scmp.eq.s32.totalorder %s18, 0
    %p45 = por %p43, %p44
    %s47 = sadd.s32 %s46, 1
    %p50 = scmp.eq.s32.totalorder %s12, 1
    %p51 = scmp.ne.s32.totalorder %s46, %s48
    %p52 = scmp.eq.s32.totalorder %s12, 0
    %p53 = por %p51, %p52
    %p54 = scmp.ne.s32.totalorder %s46, %s48
    %p55 = scmp.eq.s32.totalorder %s17, 1
    %p56 = por %p54, %p55
    %p57 = scmp.ne.s32.totalorder %s48, %s49
    %p58 = scmp.eq.s32.totalorder %s17, 0
    %p59 = por %p57, %p58
    %p60 = scmp.ne.s32.totalorder %s48, %s49
    %p61 = scmp.eq.s32.totalorder %s18, 1
    %p62 = por %p60, %p61
    %p64 = scmp.ne.s32.totalorder %s49, %s63
    %p65 = scmp.eq.s32.totalorder %s18, 0
    %p66 = por %p64, %p65
    %s67 = ssub.s32 %s12, %s19
    %p68 = scmp.eq.s32.totalorder %s67, 0
    %s70 = sadd.s32 %s69, 1
    %s71 = scalar_select %p68, %s69, %s70
    %p74 = pneg %p68
    %p75 = scmp.eq.s32.totalorder %s12, 1
    %p76 = por %p74, %p75
    %p77 = scmp.ne.s32.totalorder %s69, %s72
    %p78 = scmp.eq.s32.totalorder %s12, 0
    %p79 = por %p77, %p78
    %p80 = scmp.ne.s32.totalorder %s69, %s72
    %p81 = scmp.eq.s32.totalorder %s17, 1
    %p82 = por %p80, %p81
    %p83 = scmp.ne.s32.totalorder %s72, %s73
    %p84 = scmp.eq.s32.totalorder %s17, 0
    %p85 = por %p83, %p84
    %p86 = scmp.ne.s32.totalorder %s72, %s73
    %p87 = scmp.eq.s32.totalorder %s18, 1
    %p88 = por %p86, %p87
    %p90 = scmp.ne.s32.totalorder %s73, %s89
    %p91 = scmp.eq.s32.totalorder %s18, 0
    %p92 = por %p90, %p91
    %s94 = sadd.s32 %s93, 1
    %p97 = scmp.eq.s32.totalorder %s12, 1
    %p98 = scmp.ne.s32.totalorder %s93, %s95
    %p99 = scmp.eq.s32.totalorder %s12, 0
    %p100 = por %p98, %p99
    %p101 = scmp.ne.s32.totalorder %s93, %s95
    %p102 = scmp.eq.s32.totalorder %s17, 1
    %p103 = por %p101, %p102
    %p104 = scmp.ne.s32.totalorder %s95, %s96
    %p105 = scmp.eq.s32.totalorder %s17, 0
    %p106 = por %p104, %p105
    %p107 = scmp.ne.s32.totalorder %s95, %s96
    %p108 = scmp.eq.s32.totalorder %s18, 1
    %p109 = por %p107, %p108
    %p111 = scmp.ne.s32.totalorder %s96, %s110
    %p112 = scmp.eq.s32.totalorder %s18, 0
    %p113 = por %p111, %p112
    %s114 = ssub.s32 %s12, %s19
    %p115 = scmp.eq.s32.totalorder %s114, 0
    %s117 = sadd.s32 %s116, 1
    %s118 = scalar_select %p115, %s116, %s117
    %p121 = pneg %p115
    %p122 = scmp.eq.s32.totalorder %s12, 1
    %p123 = por %p121, %p122
    %p124 = scmp.ne.s32.totalorder %s116, %s119
    %p125 = scmp.eq.s32.totalorder %s12, 0
    %p126 = por %p124, %p125
    %p127 = scmp.ne.s32.totalorder %s116, %s119
    %p128 = scmp.eq.s32.totalorder %s17, 1
    %p129 = por %p127, %p128
    %p130 = scmp.ne.s32.totalorder %s119, %s120
    %p131 = scmp.eq.s32.totalorder %s17, 0
    %p132 = por %p130, %p131
    %p133 = scmp.ne.s32.totalorder %s119, %s120
    %p134 = scmp.eq.s32.totalorder %s18, 1
    %p135 = por %p133, %p134
    %p137 = scmp.ne.s32.totalorder %s120, %s136
    %p138 = scmp.eq.s32.totalorder %s18, 0
    %p139 = por %p137, %p138
    %s140 = ssub.s32 %s12, %s19
    %p141 = scmp.eq.s32.totalorder %s140, 0
    %s143 = sadd.s32 %s142, 1
    %s144 = scalar_select %p141, %s142, %s143
    %p147 = pneg %p141
    %p148 = scmp.eq.s32.totalorder %s12, 1
    %p149 = por %p147, %p148
    %p150 = scmp.ne.s32.totalorder %s142, %s145
    %p151 = scmp.eq.s32.totalorder %s12, 0
    %p152 = por %p150, %p151
    %p153 = scmp.ne.s32.totalorder %s142, %s145
    %p154 = scmp.eq.s32.totalorder %s17, 1
    %p155 = por %p153, %p154
    %p156 = scmp.ne.s32.totalorder %s145, %s146
    %p157 = scmp.eq.s32.totalorder %s17, 0
    %p158 = por %p156, %p157
    %p159 = scmp.ne.s32.totalorder %s145, %s146
    %p160 = scmp.eq.s32.totalorder %s18, 1
    %p161 = por %p159, %p160
    %p163 = scmp.ne.s32.totalorder %s146, %s162
    %p164 = scmp.eq.s32.totalorder %s18, 0
    %p165 = por %p163, %p164
    %s166 = ssub.s32 %s12, %s19
    %p167 = scmp.eq.s32.totalorder %s166, 0
    %s169 = sadd.s32 %s168, 1
    %s170 = scalar_select %p167, %s168, %s169
    %p173 = pneg %p167
    %p174 = scmp.eq.s32.totalorder %s12, 1
    %p175 = por %p173, %p174
    %p176 = scmp.ne.s32.totalorder %s168, %s171
    %p177 = scmp.eq.s32.totalorder %s12, 0
    %p178 = por %p176, %p177
    %p179 = scmp.ne.s32.totalorder %s168, %s171
    %p180 = scmp.eq.s32.totalorder %s17, 1
    %p181 = por %p179, %p180
    %p182 = scmp.ne.s32.totalorder %s171, %s172
    %p183 = scmp.eq.s32.totalorder %s17, 0
    %p184 = por %p182, %p183
    %p185 = scmp.ne.s32.totalorder %s171, %s172
    %p186 = scmp.eq.s32.totalorder %s18, 1
    %p187 = por %p185, %p186
    %p189 = scmp.ne.s32.totalorder %s172, %s188
    %p190 = scmp.eq.s32.totalorder %s18, 0
    %p191 = por %p189, %p190
    %p192 = scmp.le.s32.totalorder 1, %s12
    %p193 = scmp.lt.s32.totalorder %s12, 3
    %p194 = pnand %p192, %p193
    %p195 = pneg %p194
    // Predicated region
    $region9: #{tpu_custom_call.1} parent=5 // pred_check
      _
    $region10: #{tpu_custom_call.1} parent=5 // pred_check_branch
      %197 = sbr.rel (%p194) target = $region12
    $region11: #{tpu_custom_call.1} parent=5 // pred_region
      %s198 = ssub.s32 %s12, 1
      // Predicated region
      $region13: #{tpu_custom_call.1} parent=11 // pred_check
        %p199 = pneg %p59
      $region14: #{tpu_custom_call.1} parent=11 // pred_check_branch
        %201 = sbr.rel (%p199) target = $region16
      $region15: #{tpu_custom_call.1} parent=11 // pred_region
        _
      $region16: #{tpu_custom_call.1} parent=11 // pred_fallthru
        _
      // Predicated region
      $region17: #{tpu_custom_call.1} parent=11 // pred_check
        %p202 = pneg %p106
      $region18: #{tpu_custom_call.1} parent=11 // pred_check_branch
        %204 = sbr.rel (%p202) target = $region20
      $region19: #{tpu_custom_call.1} parent=11 // pred_region
        _
      $region20: #{tpu_custom_call.1} parent=11 // pred_fallthru
        _
    $region12: #{tpu_custom_call.1} parent=5 // pred_fallthru
      _
    %p205 = scmp.lt.s32.totalorder %s12, 2
    // Predicated region
    $region21: #{tpu_custom_call.1} parent=5 // pred_check
      %p206 = pneg %p205
    $region22: #{tpu_custom_call.1} parent=5 // pred_check_branch
      %208 = sbr.rel (%p206) target = $region24
    $region23: #{tpu_custom_call.1} parent=5 // pred_region
      // Predicated region
      $region25: #{tpu_custom_call.1} parent=23 // pred_check
        %p209 = pneg %p32
      $region26: #{tpu_custom_call.1} parent=23 // pred_check_branch
        %211 = sbr.rel (%p209) target = $region28
      $region27: #{tpu_custom_call.1} parent=23 // pred_region
        %s212 = smul.u32 4, %s12
        %p213 = scmp.lt.s32.totalorder %s212, 7
        %s214 = scalar_select %p213, %s212, 7
        %s215 = smul.addr %s214, 8
        %s216 = scalar_lea.vmem %s0, %s215
        %s217 = smul.u32 4, %s12
      $region28: #{tpu_custom_call.1} parent=23 // pred_fallthru
        _
      // Predicated region
      $region29: #{tpu_custom_call.1} parent=23 // pred_check
        %p218 = pneg %p79
      $region30: #{tpu_custom_call.1} parent=23 // pred_check_branch
        %220 = sbr.rel (%p218) target = $region32
      $region31: #{tpu_custom_call.1} parent=23 // pred_region
        %s221 = smul.u32 4, %s12
        %p222 = scmp.lt.s32.totalorder %s221, 7
        %s223 = scalar_select %p222, %s221, 7
        %s224 = smul.addr %s223, 8
        %s225 = scalar_lea.vmem %s2, %s224
        %s226 = smul.u32 4, %s12
      $region32: #{tpu_custom_call.1} parent=23 // pred_fallthru
        _
      // Predicated region
      $region33: #{tpu_custom_call.1} parent=23 // pred_check
        %p227 = pneg %p126
      $region34: #{tpu_custom_call.1} parent=23 // pred_check_branch
        %229 = sbr.rel (%p227) target = $region36
      $region35: #{tpu_custom_call.1} parent=23 // pred_region
        %s230 = smul.u32 4, %s12
        %p231 = scmp.lt.s32.totalorder %s230, 7
        %s232 = scalar_select %p231, %s230, 7
        %s233 = smul.addr %s232, 4
        %s234 = scalar_lea.vmem %s4, %s233
        %s235 = smul.u32 4, %s12
      $region36: #{tpu_custom_call.1} parent=23 // pred_fallthru
        _
      // Predicated region
      $region37: #{tpu_custom_call.1} parent=23 // pred_check
        %p236 = pneg %p152
      $region38: #{tpu_custom_call.1} parent=23 // pred_check_branch
        %238 = sbr.rel (%p236) target = $region40
      $region39: #{tpu_custom_call.1} parent=23 // pred_region
        %p239 = scmp.lt.s32.totalorder %s12, 1
        %s240 = scalar_select %p239, %s12, 1
        %s241 = smul.addr %s240, 8
        %s242 = scalar_lea.vmem %s5, %s241
      $region40: #{tpu_custom_call.1} parent=23 // pred_fallthru
        _
    $region24: #{tpu_custom_call.1} parent=5 // pred_fallthru
      _
    %p243 = scmp.le.s32.totalorder 1, %s12
    %p244 = scmp.lt.s32.totalorder %s12, 3
    %p245 = pnand %p243, %p244
    %p246 = pneg %p245
    // Predicated region
    $region41: #{tpu_custom_call.1} parent=5 // pred_check
      _
    $region42: #{tpu_custom_call.1} parent=5 // pred_check_branch
      %248 = sbr.rel (%p245) target = $region44
    $region43: #{tpu_custom_call.1} parent=5 // pred_region
      %s249 = ssub.s32 %s12, 1
      %s250 = smul.u32 4, %s17
      %p251 = scmp.lt.s32.totalorder %s250, 7
      %s252 = scalar_select %p251, %s250, 7
      %s253 = smul.addr %s252, 8
      %s254 = scalar_lea.vmem %s0, %s253
      %p255 = pneg %p38
      %p256 = pneg %p35
      %p257 = pneg %p59
      %p258 = pneg %p56
      %s259 = smul.u32 4, %s17
      %p260 = scmp.lt.s32.totalorder %s259, 7
      %s261 = scalar_select %p260, %s259, 7
      %s262 = smul.addr %s261, 8
      %s263 = scalar_lea.vmem %s2, %s262
      %p264 = pneg %p85
      %p265 = pneg %p82
      %p266 = pneg %p106
      %p267 = pneg %p103
      %s268 = smul.u32 4, %s17
      %p269 = scmp.lt.s32.totalorder %s268, 7
      %s270 = scalar_select %p269, %s268, 7
      %s271 = smul.addr %s270, 4
      %s272 = scalar_lea.vmem %s4, %s271
      %p273 = pneg %p132
      %p274 = pneg %p129
      %p275 = scmp.lt.s32.totalorder %s17, 1
      %s276 = scalar_select %p275, %s17, 1
      %s277 = smul.addr %s276, 8
      %s278 = scalar_lea.vmem %s5, %s277
      %p279 = pneg %p158
      %p280 = pneg %p155
      %p281 = pneg %p184
      %p282 = pneg %p181
      %s283 = smul.u32 4, %s17
      %p284 = scmp.lt.s32.totalorder %s283, 7
      %s285 = scalar_select %p284, %s283, 7
      %s286 = smul.addr %s285, 8
      %s287 = scalar_lea.vmem %s6, %s286
      %s288 = smul.u32 4, %s17
      %p289 = scmp.lt.s32.totalorder %s288, 7
      %s290 = scalar_select %p289, %s288, 7
      %s291 = smul.addr %s290, 8
      %s292 = scalar_lea.vmem %s0, %s291
      %s293 = smul.u32 4, %s17
      %s294 = smul.u32 4, %s17
      %p295 = scmp.lt.s32.totalorder %s294, 7
      %s296 = scalar_select %p295, %s294, 7
      %s297 = smul.addr %s296, 8
      %s298 = scalar_lea.vmem %s2, %s297
      %s299 = smul.u32 4, %s17
      %s300 = smul.u32 4, %s17
      %p301 = scmp.lt.s32.totalorder %s300, 7
      %s302 = scalar_select %p301, %s300, 7
      %s303 = smul.addr %s302, 4
      %s304 = scalar_lea.vmem %s4, %s303
      %s305 = smul.u32 4, %s17
      %p306 = scmp.lt.s32.totalorder %s17, 1
      %s307 = scalar_select %p306, %s17, 1
      %s308 = smul.addr %s307, 8
      %s309 = scalar_lea.vmem %s5, %s308
      %s310 = smul.u32 4, %s17
      %p311 = scmp.lt.s32.totalorder %s310, 7
      %s312 = scalar_select %p311, %s310, 7
      %s313 = smul.addr %s312, 8
      %s314 = scalar_lea.vmem %s6, %s313
      %s315 = smul.u32 4, %s17
      %v319 = vld [vmem:[%s292] sm:$0xff]
      %v320 = vld [vmem:[%s292 + $0x8] sm:$0xff]
      %v321 = vld [vmem:[%s292 + $0x10] sm:$0xff]
      %v322 = vld [vmem:[%s292 + $0x18] sm:$0xff]
      %v323 = vld [vmem:[%s1] sm:$0x1]
      %325 = vset.pattern.permute.xlu0 0
      %326 = vperm.xlu0 %325, %v319
      %v327 = vpop.permute.xlu0 %326
      %330 = vset.pattern.permute.xlu0 0
      %331 = vperm.xlu0 %330, %v320
      %v332 = vpop.permute.xlu0 %331
      %335 = vset.pattern.permute.xlu0 0
      %336 = vperm.xlu0 %335, %v321
      %v337 = vpop.permute.xlu0 %336
      %340 = vset.pattern.permute.xlu0 0
      %341 = vperm.xlu0 %340, %v322
      %v342 = vpop.permute.xlu0 %341
      %v345 = vlaneseq
      %v346 = vshrl.u32 %v345, 7
      %v347 = vsub.s32 0, %v346
      %v348 = vrot.slane %v323, %v347
      %v350 = vadd.f32 %v327, %v348
      %v351 = vadd.f32 %v332, %v348
      %v352 = vadd.f32 %v337, %v348
      %v353 = vadd.f32 %v342, %v348
      %v354 = vld [vmem:[%s304] sm:$0xf]
      %v355 = vld [vmem:[%s304 + $0x4] sm:$0xf]
      %v356 = vld [vmem:[%s304 + $0x8] sm:$0xf]
      %v357 = vld [vmem:[%s304 + $0xc] sm:$0xf]
      %v358 = vunpack.c.l.bf16 %v354
      %v359 = vunpack.c.l.bf16 %v355
      %v360 = vunpack.c.l.bf16 %v356
      %v361 = vunpack.c.l.bf16 %v357
      %v362 = vadd.f32 %v350, %v358
      %v363 = vadd.f32 %v351, %v359
      %v364 = vadd.f32 %v352, %v360
      %v365 = vadd.f32 %v353, %v361
      %vm366 = vcmp.gt.f32.partialorder %v362, 0.0
      %vm367 = vcmp.gt.f32.partialorder %v363, 0.0
      %vm368 = vcmp.gt.f32.partialorder %v364, 0.0
      %vm369 = vcmp.gt.f32.partialorder %v365, 0.0
      %v370 = vmul.f32 %v362, 0.01
      %v371 = vmul.f32 %v363, 0.01
      %v372 = vmul.f32 %v364, 0.01
      %v373 = vmul.f32 %v365, 0.01
      %v374 = vsel %vm366, %v362, %v370
      %v375 = vsel %vm367, %v363, %v371
      %v376 = vsel %vm368, %v364, %v372
      %v377 = vsel %vm369, %v365, %v373
      %v378 = vld [vmem:[%s309] sm:$0xff]
      %vm379 = vnez %v378
      %v380 = vsel %vm379, 16843009, 0
      %v381 = vunpack.c.0.s8 %v380
      %v382 = vunpack.c.1.s8 %v380
      %v383 = vunpack.c.2.s8 %v380
      %v384 = vunpack.c.3.s8 %v380
      %v385 = vpack.c.b16 %v381, %v381
      %v386 = vpack.c.b8 %v385, %v385
      %v387 = vpack.c.b16 %v382, %v382
      %v388 = vpack.c.b8 %v387, %v387
      %v389 = vpack.c.b16 %v383, %v383
      %v390 = vpack.c.b8 %v389, %v389
      %v391 = vpack.c.b16 %v384, %v384
      %v392 = vpack.c.b8 %v391, %v391
      %vm393 = vnez %v386
      %vm394 = vnez %v388
      %vm395 = vnez %v390
      %vm396 = vnez %v392
      %v397 = vsel %vm393, 16843009, 0
      %v398 = vsel %vm394, 16843009, 0
      %v399 = vsel %vm395, 16843009, 0
      %v400 = vsel %vm396, 16843009, 0
      %v401 = vunpack.c.0.s8 %v397
      %v402 = vunpack.c.0.s8 %v398
      %v403 = vunpack.c.0.s8 %v399
      %v404 = vunpack.c.0.s8 %v400
      %vm405 = vcmp.ne.s32.totalorder %v401, 0
      %vm406 = vcmp.ne.s32.totalorder %v402, 0
      %vm407 = vcmp.ne.s32.totalorder %v403, 0
      %vm408 = vcmp.ne.s32.totalorder %v404, 0
      %v409 = vsel %vm405, %v374, -1e+30
      %v410 = vsel %vm406, %v375, -1e+30
      %v411 = vsel %vm407, %v376, -1e+30
      %v412 = vsel %vm408, %v377, -1e+30
      %vm413 = vcmask 523264
      %v414 = vsel %vm413, %v409, -inf
      %415 = vmax.xlane.f32.xlu0 %v414
      %v416 = vpop.xlane.xlu0 %415
      %v417 = vsel %vm413, %v410, -inf
      %418 = vmax.xlane.f32.xlu0 %v417
      %v419 = vpop.xlane.xlu0 %418
      %v420 = vsel %vm413, %v411, -inf
      %421 = vmax.xlane.f32.xlu0 %v420
      %v422 = vpop.xlane.xlu0 %421
      %v423 = vsel %vm413, %v412, -inf
      %424 = vmax.xlane.f32.xlu0 %v423
      %v425 = vpop.xlane.xlu0 %424
      %v426 = vsub.f32 %v409, %v416
      %v427 = vsub.f32 %v410, %v419
      %v428 = vsub.f32 %v411, %v422
      %v429 = vsub.f32 %v412, %v425
      %v430 = vmul.f32 %v426, 1.442695
      %v431 = vpow.pop %v430
      %v432 = vmul.f32 %v427, 1.442695
      %v433 = vpow.pop %v432
      %v434 = vmul.f32 %v428, 1.442695
      %v435 = vpow.pop %v434
      %v436 = vmul.f32 %v429, 1.442695
      %v437 = vpow.pop %v436
      %v438 = vsel %vm413, %v431, 0.0
      %439 = vadd.xlane.f32.xlu0 %v438
      %v440 = vpop.xlane.xlu0 %439
      %v441 = vsel %vm413, %v433, 0.0
      %442 = vadd.xlane.f32.xlu0 %v441
      %v443 = vpop.xlane.xlu0 %442
      %v444 = vsel %vm413, %v435, 0.0
      %445 = vadd.xlane.f32.xlu0 %v444
      %v446 = vpop.xlane.xlu0 %445
      %v447 = vsel %vm413, %v437, 0.0
      %448 = vadd.xlane.f32.xlu0 %v447
      %v449 = vpop.xlane.xlu0 %448
      %v450 = vpack.c.bf16 %v433, %v431
      %v451 = vpack.c.bf16 %v437, %v435
      %v452 = vld [vmem:[%s3] sm:$0xf]
      %v453 = vld [vmem:[%s3 + $0x4] sm:$0xf]
      %v454 = vld [vmem:[%s3 + $0x8] sm:$0xf]
      %v455 = vld [vmem:[%s3 + $0xc] sm:$0xf]
      %v456 = vld [vmem:[%s3 + $0x10] sm:$0xf]
      %v457 = vld [vmem:[%s3 + $0x14] sm:$0xf]
      %v458 = vld [vmem:[%s3 + $0x18] sm:$0xf]
      %v459 = vld [vmem:[%s3 + $0x1c] sm:$0xf]
      %v468 = vunpack.c.l.b16 %v452
      %v469 = vunpack.c.l.b16 %v453
      %v470 = vunpack.c.l.b16 %v454
      %v471 = vunpack.c.l.b16 %v455
      %v472 = vunpack.c.l.b16 %v456
      %v473 = vunpack.c.l.b16 %v457
      %v474 = vunpack.c.l.b16 %v458
      %v475 = vunpack.c.l.b16 %v459
      %v476 = vpack.c.b16 %v469, %v468
      %v477 = vpack.c.b16 %v471, %v470
      %v478 = vpack.c.b16 %v473, %v472
      %v479 = vpack.c.b16 %v475, %v474
      %v485 = vsel %vm413, %v450, 0
      %v488 = vsel %vm413, %v451, 0
      %490 = vmatprep.subr.bf16.mxu0 0
      %491 = vmatpush1.bf16.msra.mxu0 %v476
      %492 = vmatprep.subr.bf16.mxu0 0
      %493 = vmatpush1.bf16.msra.mxu0 %v477
      %494 = vmatprep.subr.bf16.mxu0 0
      %495 = vmatpush1.bf16.msra.mxu0 %v478
      %496 = vmatprep.subr.bf16.mxu0 0
      %497 = vmatpush1.bf16.msra.mxu0 %v479
      %498 = vmatprep.subr.bf16.mxu0 0
      %499 = vmatpush1.bf16.msra.mxu0 0
      %500 = vmatprep.subr.bf16.mxu0 0
      %501 = vmatpush1.bf16.msra.mxu0 0
      %502 = vmatprep.subr.bf16.mxu0 0
      %503 = vmatpush1.bf16.msra.mxu0 0
      %504 = vmatprep.subr.bf16.mxu0 0
      %505 = vmatpush1.bf16.msra.mxu0 0
      %506 = vmatprep.subr.bf16.mxu0 0
      %507 = vmatpush1.bf16.msra.mxu0 0
      %508 = vmatprep.subr.bf16.mxu0 0
      %509 = vmatpush1.bf16.msra.mxu0 0
      %510 = vmatprep.subr.bf16.mxu0 0
      %511 = vmatpush1.bf16.msra.mxu0 0
      %512 = vmatprep.subr.bf16.mxu0 0
      %513 = vmatpush1.bf16.msra.mxu0 0
      %514 = vmatprep.subr.bf16.mxu0 0
      %515 = vmatpush1.bf16.msra.mxu0 0
      %516 = vmatprep.subr.bf16.mxu0 0
      %517 = vmatpush1.bf16.msra.mxu0 0
      %518 = vmatprep.subr.bf16.mxu0 0
      %519 = vmatpush1.bf16.msra.mxu0 0
      %520 = vmatprep.subr.bf16.mxu0 0
      %521 = vmatpush1.bf16.msra.mxu0 0
      %522 = vmatprep.mubr.bf16.mxu0 0
      %523 = vmatmul.mubr.bf16.gmra.mrb[0].mxu0 %v485
      %v524 = vpop.f32.mrb[0].mxu0
      %v525 = vadd.f32 0.0, %v524
      %v526 = vpop.f32.mrb[0].mxu0
      %v527 = vpop.f32.mrb[0].mxu0
      %v528 = vadd.f32 0.0, %v527
      %v529 = vpop.f32.mrb[0].mxu0
      %530 = vmatprep.mubr.bf16.mxu0 0
      %531 = vmatmul.mubr.bf16.gmra.mrb[0].mxu0 %v488
      %v532 = vpop.f32.mrb[0].mxu0
      %v533 = vadd.f32 0.0, %v532
      %v534 = vpop.f32.mrb[0].mxu0
      %v535 = vpop.f32.mrb[0].mxu0
      %v536 = vadd.f32 0.0, %v535
      %v537 = vpop.f32.mrb[0].mxu0
      %538 = vdwg.mxu0
      %v539 = vld [vmem:[%s298] sm:$0xff]
      %v540 = vld [vmem:[%s298 + $0x8] sm:$0xff]
      %v541 = vld [vmem:[%s298 + $0x10] sm:$0xff]
      %v542 = vld [vmem:[%s298 + $0x18] sm:$0xff]
      %v543 = vrcp.pop %v440
      %v544 = vrcp.pop %v443
      %v545 = vrcp.pop %v446
      %v546 = vrcp.pop %v449
      %v547 = vmul.f32 %v525, %v543
      %v548 = vmul.f32 %v528, %v544
      %v549 = vmul.f32 %v533, %v545
      %v550 = vmul.f32 %v536, %v546
      %v551 = vadd.f32 %v539, %v547
      %v552 = vadd.f32 %v540, %v548
      %v553 = vadd.f32 %v541, %v549
      %v554 = vadd.f32 %v542, %v550
      %v555 = vmax.f32 %v551, 0.0
      %v556 = vmax.f32 %v552, 0.0
      %v557 = vmax.f32 %v553, 0.0
      %v558 = vmax.f32 %v554, 0.0
      %vm559 = vcmask 261120
      %560 = vst.msk [vmem:[%s314] sm:$0xff] %vm559, %v555
      %561 = vst.msk [vmem:[%s314 + $0x8] sm:$0xff] %vm559, %v556
      %562 = vst.msk [vmem:[%s314 + $0x10] sm:$0xff] %vm559, %v557
      %563 = vst.msk [vmem:[%s314 + $0x18] sm:$0xff] %vm559, %v558
      %s564 = smul.u32 4, %s17
      %p565 = scmp.lt.s32.totalorder %s564, 7
      %s566 = scalar_select %p565, %s564, 7
      %s567 = smul.addr %s566, 8
      %s568 = scalar_lea.vmem %s6, %s567
      // Predicated region
      $region45: #{tpu_custom_call.1} parent=43 // pred_check
        %p569 = pneg %p181
      $region46: #{tpu_custom_call.1} parent=43 // pred_check_branch
        %571 = sbr.rel (%p569) target = $region48
      $region47: #{tpu_custom_call.1} parent=43 // pred_region
        %s572 = smul.u32 4, %s17
      $region48: #{tpu_custom_call.1} parent=43 // pred_fallthru
        _
    $region44: #{tpu_custom_call.1} parent=5 // pred_fallthru
      _
    %p573 = scmp.le.s32.totalorder 2, %s12
    // Predicated region
    $region49: #{tpu_custom_call.1} parent=5 // pred_check
      %p574 = pneg %p573
    $region50: #{tpu_custom_call.1} parent=5 // pred_check_branch
      %576 = sbr.rel (%p574) target = $region52
    $region51: #{tpu_custom_call.1} parent=5 // pred_region
      %s577 = ssub.s32 %s12, 2
      // Predicated region
      $region53: #{tpu_custom_call.1} parent=51 // pred_check
        %p578 = pneg %p187
      $region54: #{tpu_custom_call.1} parent=51 // pred_check_branch
        %580 = sbr.rel (%p578) target = $region56
      $region55: #{tpu_custom_call.1} parent=51 // pred_region
        %s581 = smul.u32 4, %s18
        %p582 = scmp.lt.s32.totalorder %s581, 7
        %s583 = scalar_select %p582, %s581, 7
        %s584 = smul.addr %s583, 8
        %s585 = scalar_lea.vmem %s6, %s584
      $region56: #{tpu_custom_call.1} parent=51 // pred_fallthru
        _
    $region52: #{tpu_custom_call.1} parent=5 // pred_fallthru
      _
  $region6: #{tpu_custom_call.1} parent=0 // loop_footer
    %s16 = sadd.s32 1, %s12
  $region7: #{tpu_custom_call.1} parent=0 // loop_footer_branch
    %11 = sbr.rel target = $region3
  $region8: #{tpu_custom_call.1} parent=0 // loop_exit
    _

</llo_original>
